<compile_context>
chip_gen: v7x
topology: tpu7x:2x2x1
jax: 0.10.0
libtpu: 0.0.40
codegen_flags: <defaults>
</compile_context>

<pallas_src>
import jax
import jax.numpy as jnp
from jax import lax
from jax.experimental import pallas as pl
from jax.experimental.pallas import tpu as pltpu

BN_EPS = 1e-5


# --------------------------------------------------------------------------
# Hardware queries (defensive: fall back to conservative defaults).
# --------------------------------------------------------------------------
def _device_kind():
    try:
        return jax.devices()[0].device_kind.lower()
    except Exception:
        return ""


def _vmem_capacity_bytes():
    try:
        info_fn = getattr(pltpu, "get_tpu_info", None)
        if info_fn is not None:
            cap = getattr(info_fn(), "vmem_capacity_bytes", None)
            if cap:
                return int(cap)
    except Exception:
        pass
    # v7x has 64 MiB per TensorCore; v5e/v6e have 128 MiB.
    return 64 * 1024 * 1024 if "v7" in _device_kind() else 128 * 1024 * 1024


def _num_tensorcores():
    # Only v7x has 2 TensorCores per chip; v5e/v6e have 1.
    return 2 if "v7" in _device_kind() else 1


# --------------------------------------------------------------------------
# Kernels
# --------------------------------------------------------------------------
def _bn_prelu_store(y, gb_ref, alpha_ref, o_ref):
    # BatchNorm1d training-mode batch stats (two-pass variance for stability),
    # fused affine (one FMA pass), then PReLU (single shared alpha).
    mean = jnp.mean(y, axis=0, keepdims=True)            # (1, TN)
    d = y - mean
    var = jnp.mean(d * d, axis=0, keepdims=True)         # (1, TN)
    gamma = gb_ref[0:1, :]                               # (1, TN)
    beta = gb_ref[1:2, :]                                # (1, TN)
    scale = gamma * lax.rsqrt(var + BN_EPS)              # (1, TN)
    y_bn = d * scale + beta                              # (B, TN)
    alpha = alpha_ref[0, 0]
    o_ref[...] = jnp.where(y_bn > 0, y_bn, alpha * y_bn).astype(o_ref.dtype)


def _matmul_tile(x_ref, w_ref):
    xa = x_ref[...]
    wa = w_ref[...]
    if xa.dtype != wa.dtype:                    # trace-time branch
        ct = jnp.promote_types(xa.dtype, wa.dtype)
        xa = xa.astype(ct)
        wa = wa.astype(ct)
    return jnp.dot(xa, wa, preferred_element_type=jnp.float32)


def _fused_kernel(alpha_ref, x_ref, w_ref, gb_ref, o_ref):
    # Single K step: no accumulator scratch; dot feeds BN/PReLU directly.
    _bn_prelu_store(_matmul_tile(x_ref, w_ref), gb_ref, alpha_ref, o_ref)


def _accum_kernel(alpha_ref, x_ref, w_ref, gb_ref, o_ref, acc_ref):
    k = pl.program_id(1)
    partial = _matmul_tile(x_ref, w_ref)

    @pl.when(k == 0)
    def _first():
        acc_ref[...] = partial                  # direct store: no zero-init pass

    @pl.when(k != 0)
    def _rest():
        acc_ref[...] += partial

    @pl.when(k == pl.num_programs(1) - 1)
    def _finalize():
        _bn_prelu_store(acc_ref[...], gb_ref, alpha_ref, o_ref)


# --------------------------------------------------------------------------
# Tile selection
# --------------------------------------------------------------------------
def _pick_tiles(B, d_in, d_out, x_item, w_item, out_item, vmem_budget, n_cores):
    """Returns (x_resident, tn, tk).  tk == d_in means x stays fully resident."""
    if d_out % 128 == 0:
        tn_cands = [c for c in (2048, 1024, 512, 256, 128) if d_out % c == 0]
    else:
        tn_cands = [d_out]                      # full-dim block (always legal)

    def resident_bytes(tn):
        return (2 * B * d_in * x_item           # x buffers (fetched once)
                + 2 * d_in * tn * w_item        # W double-buffer
                + 2 * B * tn * out_item         # output double-buffer
                + 4 * tn * 4)                   # gamma/beta tile

    def split_bytes(tn, tk):
        return (2 * B * tk * x_item
                + 2 * tk * tn * w_item
                + 2 * B * tn * out_item
                + B * tn * 4                    # f32 accumulator
                + 4 * tn * 4)

    def pick_tn(fits):
        cands = [c for c in tn_cands if fits(c)]
        if not cands:
            return None
        if n_cores > 1:
            # Keep both TensorCores busy: prefer >= 2 j-steps per core, then
            # >= 1 per core; otherwise take the largest fitting tile.
            for min_steps in (2 * n_cores, n_cores):
                good = [c for c in cands if d_out // c >= min_steps]
                if good:
                    return max(good)
        return max(cands)

    # Preferred: x fully resident in VMEM -> x streamed from HBM exactly once.
    tn = pick_tn(lambda c: resident_bytes(c) <= vmem_budget)
    if tn is not None:
        return True, tn, d_in

    # Fallback: tile the reduction axis (pad d_in to a multiple of 128 if
    # needed; zero padding is exact for the matmul).
    d_in_p = -(-d_in // 128) * 128
    tk_cands = [c for c in (2048, 1024, 512, 256, 128) if d_in_p % c == 0]
    tn = pick_tn(lambda c: split_bytes(c, 128) <= vmem_budget)
    if tn is None:
        tn = min(tn_cands)
    tk = max([c for c in tk_cands if split_bytes(tn, c) <= vmem_budget],
             default=128)
    return False, tn, tk


# --------------------------------------------------------------------------
# Wrapper
# --------------------------------------------------------------------------
def dense_block(x, w, b, gamma, beta, alpha, *, out_dtype=None, tn=None, tk=None):
    """Linear -> BatchNorm1d (training-mode batch stats) -> PReLU.

    x: (B, D_in); w: (D_in, D_out) (transposed PyTorch weight) -- streamed in
    whatever dtype it is stored in (store it in bf16 once at parameter
    creation to halve the dominant W HBM stream; no per-call astype is done
    here); b: (1, D_out), accepted for API parity but never added (the BN
    batch-mean subtraction cancels a per-feature constant exactly);
    gamma/beta: (1, D_out); alpha: PReLU weight (single shared parameter).

    Note: with small B the MXU is mostly idle and the kernel is HBM-bound on
    the W stream; B >= 128 (v5e) / 256 (v6e/v7x) amortizes the same weight
    traffic into compute-bound territory.
    """
    B, d_in = x.shape
    d_out = w.shape[1]
    out_dtype = x.dtype if out_dtype is None else out_dtype

    del b  # exact no-op for the forward output under training-mode BN

    x_item = jnp.dtype(x.dtype).itemsize
    w_item = jnp.dtype(w.dtype).itemsize
    out_item = jnp.dtype(out_dtype).itemsize

    vmem_cap = _vmem_capacity_bytes()
    n_cores = _num_tensorcores()
    vmem_budget = int(0.6 * vmem_cap)

    auto_res, auto_tn, auto_tk = _pick_tiles(
        B, d_in, d_out, x_item, w_item, out_item, vmem_budget, n_cores)
    tn = auto_tn if tn is None else tn
    tk = auto_tk if tk is None else tk
    x_resident = (tk == d_in)
    assert d_out % tn == 0, (d_out, tn)

    gb = jnp.concatenate(
        [jnp.asarray(gamma, jnp.float32).reshape(1, d_out),
         jnp.asarray(beta, jnp.float32).reshape(1, d_out)], axis=0)  # (2, D_out)
    alpha = jnp.asarray(alpha, dtype=jnp.float32).reshape(1, 1)

    if x_resident:
        grid = (d_out // tn,)
        in_specs = [
            pl.BlockSpec(memory_space=pltpu.MemorySpace.SMEM),       # alpha
            # x: whole (B, D_in) block, constant index -> fetched once.
            pl.BlockSpec((B, d_in), lambda j: (0, 0)),
            pl.BlockSpec((d_in, tn), lambda j: (0, j)),              # W slab
            pl.BlockSpec((2, tn), lambda j: (0, j)),                 # gamma/beta
        ]
        out_specs = pl.BlockSpec((B, tn), lambda j: (0, j))
        scratch_shapes = []
        kernel = _fused_kernel
        dims = ("parallel",)
        need = (2 * B * d_in * x_item + 2 * d_in * tn * w_item
                + 2 * B * tn * out_item + 4 * tn * 4)
    else:
        d_in_p = -(-d_in // tk) * tk
        if d_in_p != d_in:
            # Zero padding of the reduction axis is exact for the matmul.
            x = jnp.pad(x, ((0, 0), (0, d_in_p - d_in)))
            w = jnp.pad(w, ((0, d_in_p - d_in), (0, 0)))
        grid = (d_out // tn, d_in_p // tk)      # reduction axis innermost
        in_specs = [
            pl.BlockSpec(memory_space=pltpu.MemorySpace.SMEM),
            pl.BlockSpec((B, tk), lambda j, k: (0, k)),
            pl.BlockSpec((tk, tn), lambda j, k: (k, j)),
            pl.BlockSpec((2, tn), lambda j, k: (0, j)),
        ]
        out_specs = pl.BlockSpec((B, tn), lambda j, k: (0, j))
        scratch_shapes = [pltpu.VMEM((B, tn), jnp.float32)]
        kernel = _accum_kernel
        dims = ("parallel", "arbitrary")
        need = (2 * B * tk * x_item + 2 * tk * tn * w_item
                + 2 * B * tn * out_item + B * tn * 4 + 4 * tn * 4)

    # Scoped VMEM limit: actual need + 50% headroom, capped at 80% of physical
    # capacity (leaves room for Mosaic internal scratch on v7x's 64 MiB;
    # v5e/v6e get well above their 16/32 MiB scoped defaults).
    vmem_limit = int(min(max(need + need // 2, 32 * 1024 * 1024),
                         int(0.8 * vmem_cap)))

    return pl.pallas_call(
        kernel,
        out_shape=jax.ShapeDtypeStruct((B, d_out), out_dtype),
        grid_spec=pltpu.PrefetchScalarGridSpec(
            num_scalar_prefetch=0,
            grid=grid,
            in_specs=in_specs,
            out_specs=out_specs,
            scratch_shapes=scratch_shapes,
        ),
        compiler_params=pltpu.CompilerParams(
            dimension_semantics=dims,
            vmem_limit_bytes=vmem_limit,
        ),
    )(alpha, x, w, gb)


def reference(x, w, b, gamma, beta, alpha):
    y = x @ w + b
    mean = jnp.mean(y, axis=0, keepdims=True)
    var = jnp.mean((y - mean) ** 2, axis=0, keepdims=True)
    y_bn = (y - mean) / jnp.sqrt(var + BN_EPS) * gamma + beta
    a = alpha.reshape(())
    return jnp.where(y_bn > 0, y_bn, a * y_bn)


if __name__ == "__main__":
    key = jax.random.PRNGKey(0)
    B, D_IN, D_OUT = 8, 128, 256

    k_x, k_w, k_b, k_g, k_be = jax.random.split(key, 5)
    x = jax.random.normal(k_x, (B, D_IN), dtype=jnp.float32)

    # PyTorch Linear init shapes: weight (out, in), bias (out,)
    bound = 1.0 / jnp.sqrt(D_IN)
    w_pt = jax.random.uniform(k_w, (D_OUT, D_IN), minval=-bound, maxval=bound,
                              dtype=jnp.float32)
    b_pt = jax.random.uniform(k_b, (D_OUT,), minval=-bound, maxval=bound,
                              dtype=jnp.float32)
    w = w_pt.T                                   # (D_IN, D_OUT)
    b = b_pt.reshape(1, D_OUT)

    # BatchNorm1d affine params (randomized to exercise the fused affine) and
    # PReLU alpha (PyTorch default init 0.25).
    gamma = 1.0 + 0.1 * jax.random.normal(k_g, (1, D_OUT), dtype=jnp.float32)
    beta = 0.1 * jax.random.normal(k_be, (1, D_OUT), dtype=jnp.float32)
    alpha = jnp.full((1, 1), 0.25, dtype=jnp.float32)

    ref = reference(x, w, b, gamma, beta, alpha)

    # f32 path (x-resident fused kernel): exact forward semantics.
    out = jax.block_until_ready(dense_block(x, w, b, gamma, beta, alpha))
    assert out.shape == (B, D_OUT) and out.dtype == jnp.float32
    err = float(jnp.max(jnp.abs(out - ref)))
    assert jnp.allclose(out, ref, atol=1e-4, rtol=1e-4), err

    # bf16-stored weights/activations (cast ONCE here, i.e. "at parameter
    # creation"; the wrapper does no per-call astype) + bf16 output.
    w_bf16 = w.astype(jnp.bfloat16)
    x_bf16 = x.astype(jnp.bfloat16)
    out_bf16 = jax.block_until_ready(
        dense_block(x_bf16, w_bf16, b, gamma, beta, alpha,
                    out_dtype=jnp.bfloat16))
    assert out_bf16.shape == (B, D_OUT) and out_bf16.dtype == jnp.bfloat16
    out_bf16_f32 = out_bf16.astype(jnp.float32)
    assert bool(jnp.all(jnp.isfinite(out_bf16_f32)))
    assert float(jnp.max(jnp.abs(out_bf16_f32 - ref))) < 0.25

    # Exercise the k-split accumulator path (reduction axis tiled).
    D_IN2 = 256
    x2 = jax.random.normal(jax.random.PRNGKey(1), (B, D_IN2), dtype=jnp.float32)
    w2 = jax.random.uniform(jax.random.PRNGKey(2), (D_IN2, D_OUT),
                            minval=-bound, maxval=bound, dtype=jnp.float32)
    ref2 = reference(x2, w2, b, gamma, beta, alpha)
    out2 = jax.block_until_ready(
        dense_block(x2, w2, b, gamma, beta, alpha, tn=128, tk=128))
    assert jnp.allclose(out2, ref2, atol=1e-4, rtol=1e-4)

    print("KERNEL_OK")
</pallas_src>

<mosaic_0001>
module attributes {stable_mosaic.version = 11 : i64} {
  func.func @_fused_kernel(%arg0: i32, %arg1: memref<1x1xf32, #tpu.memory_space<smem>>, %arg2: memref<8x128xf32, #tpu.memory_space<vmem>>, %arg3: memref<128x256xf32, #tpu.memory_space<vmem>>, %arg4: memref<2x256xf32, #tpu.memory_space<vmem>>, %arg5: memref<8x256xf32, #tpu.memory_space<vmem>>) attributes {dimension_semantics = [#tpu.dimension_semantics<parallel>], iteration_bounds = array<i64: 1>, scalar_prefetch = 0 : i64, scratch_operands = 0 : i64, tpu.core_type = #tpu.core_type<tc>, window_params = [{transform_indices = @transform_0, window_bounds = array<i64: 1, 1>}, {pipeline_mode = #tpu.pipeline_mode<synchronous>, transform_indices = @transform_1, window_bounds = array<i64: 8, 128>}, {transform_indices = @transform_2, window_bounds = array<i64: 128, 256>}, {transform_indices = @transform_3, window_bounds = array<i64: 2, 256>}, {transform_indices = @transform_4, window_bounds = array<i64: 8, 256>}]} {
    %c0 = arith.constant 0 : index
    %c0_0 = arith.constant 0 : index
    %0 = vector.load %arg2[%c0, %c0_0] : memref<8x128xf32, #tpu.memory_space<vmem>>, vector<8x128xf32>
    %c0_1 = arith.constant 0 : index
    %c0_2 = arith.constant 0 : index
    %1 = vector.load %arg3[%c0_1, %c0_2] : memref<128x256xf32, #tpu.memory_space<vmem>>, vector<128x256xf32>
    %cst = arith.constant dense<0.000000e+00> : vector<8x256xf32>
    %2 = tpu.matmul %0, %1, %cst {dimension_numbers = #tpu.dot_dimension_numbers<[1], [0], [0], [1], [0, 0, 1, 1], [], []>} : vector<8x128xf32>, vector<128x256xf32>, vector<8x256xf32> -> vector<8x256xf32>
    %cst_3 = arith.constant dense<0.000000e+00> : vector<256xf32>
    %3 = vector.multi_reduction <add>, %2, %cst_3 [0] : vector<8x256xf32> to vector<256xf32>
    %4 = vector.shape_cast %3 : vector<256xf32> to vector<1x256xf32>
    %cst_4 = arith.constant 8.000000e+00 : f32
    %5 = vector.broadcast %cst_4 : f32 to vector<1x256xf32>
    %6 = arith.divf %4, %5 : vector<1x256xf32>
    %7 = vector.broadcast %6 : vector<1x256xf32> to vector<8x256xf32>
    %8 = arith.subf %2, %7 : vector<8x256xf32>
    %9 = arith.mulf %8, %8 : vector<8x256xf32>
    %cst_5 = arith.constant dense<0.000000e+00> : vector<256xf32>
    %10 = vector.multi_reduction <add>, %9, %cst_5 [0] : vector<8x256xf32> to vector<256xf32>
    %11 = vector.shape_cast %10 : vector<256xf32> to vector<1x256xf32>
    %cst_6 = arith.constant 8.000000e+00 : f32
    %12 = vector.broadcast %cst_6 : f32 to vector<1x256xf32>
    %13 = arith.divf %11, %12 : vector<1x256xf32>
    %c0_7 = arith.constant 0 : index
    %c0_8 = arith.constant 0 : index
    %14 = vector.load %arg4[%c0_7, %c0_8] : memref<2x256xf32, #tpu.memory_space<vmem>>, vector<1x256xf32>
    %c1 = arith.constant 1 : index
    %c0_9 = arith.constant 0 : index
    %15 = vector.load %arg4[%c1, %c0_9] : memref<2x256xf32, #tpu.memory_space<vmem>>, vector<1x256xf32>
    %cst_10 = arith.constant 9.99999974E-6 : f32
    %16 = vector.broadcast %cst_10 : f32 to vector<1x256xf32>
    %17 = arith.addf %13, %16 : vector<1x256xf32>
    %18 = math.rsqrt %17 : vector<1x256xf32>
    %19 = arith.mulf %14, %18 : vector<1x256xf32>
    %20 = vector.broadcast %19 : vector<1x256xf32> to vector<8x256xf32>
    %21 = arith.mulf %8, %20 : vector<8x256xf32>
    %22 = vector.broadcast %15 : vector<1x256xf32> to vector<8x256xf32>
    %23 = arith.addf %21, %22 : vector<8x256xf32>
    %c0_11 = arith.constant 0 : index
    %c0_12 = arith.constant 0 : index
    %24 = memref.load %arg1[%c0_11, %c0_12] : memref<1x1xf32, #tpu.memory_space<smem>>
    %cst_13 = arith.constant 0.000000e+00 : f32
    %25 = vector.broadcast %cst_13 : f32 to vector<8x256xf32>
    %26 = arith.cmpf ogt, %23, %25 : vector<8x256xf32>
    %27 = vector.broadcast %24 : f32 to vector<8x256xf32>
    %28 = arith.mulf %27, %23 : vector<8x256xf32>
    %29 = arith.select %26, %23, %28 : vector<8x256xi1>, vector<8x256xf32>
    %c0_14 = arith.constant 0 : index
    %c0_15 = arith.constant 0 : index
    %30 = vector.load %arg5[%c0_14, %c0_15] : memref<8x256xf32, #tpu.memory_space<vmem>>, vector<8x256xf32>
    tpu.vector_store %arg5[%c0_14, %c0_15], %29 {strides = array<i32>} : memref<8x256xf32, #tpu.memory_space<vmem>>, vector<8x256xf32>,
    return
  }
  func.func @transform_0(%arg0: i32) -> (i32, i32) {
    %c0_i32 = arith.constant 0 : i32
    %c0_i32_0 = arith.constant 0 : i32
    %c0_i32_1 = arith.constant 0 : i32
    return %c0_i32, %c0_i32_0 : i32, i32
  }
  func.func @transform_1(%arg0: i32) -> (i32, i32) {
    %c0_i32 = arith.constant 0 : i32
    %c0_i32_0 = arith.constant 0 : i32
    %c0_i32_1 = arith.constant 0 : i32
    return %c0_i32, %c0_i32_0 : i32, i32
  }
  func.func @transform_2(%arg0: i32) -> (i32, i32) {
    %c0_i32 = arith.constant 0 : i32
    %c0_i32_0 = arith.constant 0 : i32
    return %c0_i32, %arg0 : i32, i32
  }
  func.func @transform_3(%arg0: i32) -> (i32, i32) {
    %c0_i32 = arith.constant 0 : i32
    %c0_i32_0 = arith.constant 0 : i32
    return %c0_i32, %arg0 : i32, i32
  }
  func.func @transform_4(%arg0: i32) -> (i32, i32) {
    %c0_i32 = arith.constant 0 : i32
    %c0_i32_0 = arith.constant 0 : i32
    return %c0_i32, %arg0 : i32, i32
  }
}

</mosaic_0001>

<llo_original>
// kernel: tpu_custom_call.1
$region0: #{tpu_custom_call.1}
  #allocation0 [shape = 'u32[]', space=smem, size = 0x4, offset = 0x4, fixed_abs, tag = 'smem constant byte address 0x4 - core index']
  #allocation1 [shape = 'u32[144,128]{1,0:T(1,128)}', space=vmem, size = 0x12000, scoped, tag = 'internal scratch']
  #allocation2 [shape = 'f32[1,1]{1,0:T(1,128)S(6)}', space=smem, size = 0x200, scoped, tag = 'scoped memory for tpu_custom_call.1']
  %s0 = inlined_call_operand.<no memory space> [shape: f32[1,1], index: 0, kind: input, shape index: {}]
  %s1 = inlined_call_operand.hbm [shape: f32[8,128], index: 1, kind: input, shape index: {}]
  %s2 = inlined_call_operand.hbm [shape: f32[128,256], index: 2, kind: input, shape index: {}]
  %s3 = inlined_call_operand.vmem [shape: f32[2,256], index: 3, kind: input, shape index: {}]
  %s4 = inlined_call_operand.hbm [shape: f32[8,256], index: 4, kind: output, shape index: {}]
  %s5 = sld [smem:[#allocation0]]
  $region34: #{tpu_custom_call.1} parent=0
    _
  %s7 = ssub.s32 1, %s5
  %s8 = scalar_select 0, %s7, %s5
  %9 = sst [smem:[#allocation2]] %s0
  $region1: #{tpu_custom_call.1} parent=0
    #allocation3 [shape = 'u8[4096]{0}', space=vmem, size = 0x1000, scoped, tag = 'input window, operand 1, single buffered']
    #allocation4 [shape = 's32[1]{0}', space=sflag, size = 0x4, scoped, tag = 'scoped memory for tpu_custom_call.1']
    #allocation5 [shape = 's32[1]{0}', space=sflag, size = 0x4, scoped, tag = 'scoped memory for tpu_custom_call.1']
    #allocation6 [shape = 'u8[131072]{0}', space=vmem, size = 0x20000, scoped, tag = 'input window, operand 2, single buffered']
    #allocation7 [shape = 's32[1]{0}', space=sflag, size = 0x4, scoped, tag = 'scoped memory for tpu_custom_call.1']
    #allocation8 [shape = 'u8[8192]{0}', space=vmem, size = 0x2000, scoped, tag = 'output window, operand 0, single buffered']
    %10 = vsyncpa [#allocation4], 0
    %11 = vsyncpa [#allocation7], 0
    %12 = vsyncpa [#allocation5], 0
    // Predicated region
    $region2: #{tpu_custom_call.1} parent=1 // pred_check
      _
    $region3: #{tpu_custom_call.1} parent=1 // pred_check_branch
      %14 = sbr.rel (0) target = $region5
    $region4: #{tpu_custom_call.1} parent=1 // pred_region
      _
    $region5: #{tpu_custom_call.1} parent=1 // pred_fallthru
      _
    // Predicated region
    $region6: #{tpu_custom_call.1} parent=1 // pred_check
      _
    $region7: #{tpu_custom_call.1} parent=1 // pred_check_branch
      %16 = sbr.rel (0) target = $region9
    $region8: #{tpu_custom_call.1} parent=1 // pred_region
      %s18 = ssub.s32 128, 128
      %19 = vsyncadd [#allocation4], %s18
      %s21 = sshll.u32 [#allocation3], 4
      %s22 = int_to_ptr.vmem [resolvable:$true] %s21
      %24 = dma.hbm_to_vmem [thread:$0]  %s1, 128, %s22, [#allocation4]
    $region9: #{tpu_custom_call.1} parent=1 // pred_fallthru
      _
    // Predicated region
    $region10: #{tpu_custom_call.1} parent=1 // pred_check
      _
    $region11: #{tpu_custom_call.1} parent=1 // pred_check_branch
      %26 = sbr.rel (0) target = $region13
    $region12: #{tpu_custom_call.1} parent=1 // pred_region
      %s28 = ssub.s32 4096, 4096
      %29 = vsyncadd [#allocation7], %s28
      %s30 = sshll.u32 [#allocation6], 4
      %s31 = int_to_ptr.vmem [resolvable:$true] %s30
      %36 = dma.hbm_to_vmem [thread:$0]  %s2, 4096, %s31, [#allocation7], 256, 256, 16
    $region13: #{tpu_custom_call.1} parent=1 // pred_fallthru
      _
    // Predicated region
    $region14: #{tpu_custom_call.1} parent=1 // pred_check
      _
    $region15: #{tpu_custom_call.1} parent=1 // pred_check_branch
      %38 = sbr.rel (0) target = $region17
    $region16: #{tpu_custom_call.1} parent=1 // pred_region
      _
    $region17: #{tpu_custom_call.1} parent=1 // pred_fallthru
      _
    // Predicated region
    $region18: #{tpu_custom_call.1} parent=1 // pred_check
      _
    $region19: #{tpu_custom_call.1} parent=1 // pred_check_branch
      %40 = sbr.rel (0) target = $region21
    $region20: #{tpu_custom_call.1} parent=1 // pred_region
      %41 = dma.done [#allocation4], 128
    $region21: #{tpu_custom_call.1} parent=1 // pred_fallthru
      _
    // Predicated region
    $region22: #{tpu_custom_call.1} parent=1 // pred_check
      _
    $region23: #{tpu_custom_call.1} parent=1 // pred_check_branch
      %43 = sbr.rel (0) target = $region25
    $region24: #{tpu_custom_call.1} parent=1 // pred_region
      %44 = dma.done [#allocation7], 4096
    $region25: #{tpu_custom_call.1} parent=1 // pred_fallthru
      _
    %v45 = vld [vmem:[#allocation3] sm:$0xff]
    %v46 = vld [vmem:[#allocation6] sm:$0xff]
    %v47 = vld [vmem:[#allocation6 + $0x8] sm:$0xff]
    %v48 = vld [vmem:[#allocation6 + $0x10] sm:$0xff]
    %v49 = vld [vmem:[#allocation6 + $0x18] sm:$0xff]
    %v50 = vld [vmem:[#allocation6 + $0x20] sm:$0xff]
    %v51 = vld [vmem:[#allocation6 + $0x28] sm:$0xff]
    %v52 = vld [vmem:[#allocation6 + $0x30] sm:$0xff]
    %v53 = vld [vmem:[#allocation6 + $0x38] sm:$0xff]
    %v54 = vld [vmem:[#allocation6 + $0x40] sm:$0xff]
    %v55 = vld [vmem:[#allocation6 + $0x48] sm:$0xff]
    %v56 = vld [vmem:[#allocation6 + $0x50] sm:$0xff]
    %v57 = vld [vmem:[#allocation6 + $0x58] sm:$0xff]
    %v58 = vld [vmem:[#allocation6 + $0x60] sm:$0xff]
    %v59 = vld [vmem:[#allocation6 + $0x68] sm:$0xff]
    %v60 = vld [vmem:[#allocation6 + $0x70] sm:$0xff]
    %v61 = vld [vmem:[#allocation6 + $0x78] sm:$0xff]
    %v62 = vld [vmem:[#allocation6 + $0x80] sm:$0xff]
    %v63 = vld [vmem:[#allocation6 + $0x88] sm:$0xff]
    %v64 = vld [vmem:[#allocation6 + $0x90] sm:$0xff]
    %v65 = vld [vmem:[#allocation6 + $0x98] sm:$0xff]
    %v66 = vld [vmem:[#allocation6 + $0xa0] sm:$0xff]
    %v67 = vld [vmem:[#allocation6 + $0xa8] sm:$0xff]
    %v68 = vld [vmem:[#allocation6 + $0xb0] sm:$0xff]
    %v69 = vld [vmem:[#allocation6 + $0xb8] sm:$0xff]
    %v70 = vld [vmem:[#allocation6 + $0xc0] sm:$0xff]
    %v71 = vld [vmem:[#allocation6 + $0xc8] sm:$0xff]
    %v72 = vld [vmem:[#allocation6 + $0xd0] sm:$0xff]
    %v73 = vld [vmem:[#allocation6 + $0xd8] sm:$0xff]
    %v74 = vld [vmem:[#allocation6 + $0xe0] sm:$0xff]
    %v75 = vld [vmem:[#allocation6 + $0xe8] sm:$0xff]
    %v76 = vld [vmem:[#allocation6 + $0xf0] sm:$0xff]
    %v77 = vld [vmem:[#allocation6 + $0xf8] sm:$0xff]
    %78 = vmatprep.subr.mxu0 %v47
    %79 = vmatpush1.msra.mxu0 %v46
    %80 = vmatprep.subr.mxu0 %v49
    %81 = vmatpush1.msra.mxu0 %v48
    %82 = vmatprep.subr.mxu0 %v51
    %83 = vmatpush1.msra.mxu0 %v50
    %84 = vmatprep.subr.mxu0 %v53
    %85 = vmatpush1.msra.mxu0 %v52
    %86 = vmatprep.subr.mxu0 %v55
    %87 = vmatpush1.msra.mxu0 %v54
    %88 = vmatprep.subr.mxu0 %v57
    %89 = vmatpush1.msra.mxu0 %v56
    %90 = vmatprep.subr.mxu0 %v59
    %91 = vmatpush1.msra.mxu0 %v58
    %92 = vmatprep.subr.mxu0 %v61
    %93 = vmatpush1.msra.mxu0 %v60
    %94 = vmatprep.subr.mxu0 %v63
    %95 = vmatpush1.msra.mxu0 %v62
    %96 = vmatprep.subr.mxu0 %v65
    %97 = vmatpush1.msra.mxu0 %v64
    %98 = vmatprep.subr.mxu0 %v67
    %99 = vmatpush1.msra.mxu0 %v66
    %100 = vmatprep.subr.mxu0 %v69
    %101 = vmatpush1.msra.mxu0 %v68
    %102 = vmatprep.subr.mxu0 %v71
    %103 = vmatpush1.msra.mxu0 %v70
    %104 = vmatprep.subr.mxu0 %v73
    %105 = vmatpush1.msra.mxu0 %v72
    %106 = vmatprep.subr.mxu0 %v75
    %107 = vmatpush1.msra.mxu0 %v74
    %108 = vmatprep.subr.mxu0 %v77
    %109 = vmatpush1.msra.mxu0 %v76
    %110 = vmatprep.subr.mxu0 0.0
    %111 = vmatpush1.msra.mxu0 0.0
    %112 = vmatprep.subr.mxu0 0.0
    %113 = vmatpush1.msra.mxu0 0.0
    %114 = vmatprep.subr.mxu0 0.0
    %115 = vmatpush1.msra.mxu0 0.0
    %116 = vmatprep.subr.mxu0 0.0
    %117 = vmatpush1.msra.mxu0 0.0
    %118 = vmatprep.subr.mxu0 0.0
    %119 = vmatpush1.msra.mxu0 0.0
    %120 = vmatprep.subr.mxu0 0.0
    %121 = vmatpush1.msra.mxu0 0.0
    %122 = vmatprep.subr.mxu0 0.0
    %123 = vmatpush1.msra.mxu0 0.0
    %124 = vmatprep.subr.mxu0 0.0
    %125 = vmatpush1.msra.mxu0 0.0
    %126 = vmatprep.subr.mxu0 0.0
    %127 = vmatpush1.msra.mxu0 0.0
    %128 = vmatprep.subr.mxu0 0.0
    %129 = vmatpush1.msra.mxu0 0.0
    %130 = vmatprep.subr.mxu0 0.0
    %131 = vmatpush1.msra.mxu0 0.0
    %132 = vmatprep.subr.mxu0 0.0
    %133 = vmatpush1.msra.mxu0 0.0
    %134 = vmatprep.subr.mxu0 0.0
    %135 = vmatpush1.msra.mxu0 0.0
    %136 = vmatprep.subr.mxu0 0.0
    %137 = vmatpush1.msra.mxu0 0.0
    %138 = vmatprep.subr.mxu0 0.0
    %139 = vmatpush1.msra.mxu0 0.0
    %140 = vmatprep.subr.mxu0 0.0
    %141 = vmatpush1.msra.mxu0 0.0
    %142 = vmatprep.mubr.f32.mxu0 0.0
    %143 = vmatmul.mubr.f32.gmra.mrb[0].mxu0 %v45
    %v144 = vpop.f32.mrb[0].mxu0
    %v145 = vadd.f32 0.0, %v144
    %v146 = vpop.f32.mrb[0].mxu0
    %v147 = vadd.f32 0.0, %v146
    %148 = vdwg.mxu0
    %v149 = vrot.slane %v145, 4
    %v150 = vadd.f32 %v145, %v149
    %v151 = vrot.slane %v150, 2
    %v152 = vadd.f32 %v150, %v151
    %v153 = vrot.slane %v152, 1
    %v154 = vadd.f32 %v152, %v153
    %v155 = vrot.slane %v147, 4
    %v156 = vadd.f32 %v147, %v155
    %v157 = vrot.slane %v156, 2
    %v158 = vadd.f32 %v156, %v157
    %v159 = vrot.slane %v158, 1
    %v160 = vadd.f32 %v158, %v159
    %v161 = vrcp.pop 8.0
    %v162 = vmul.f32 %v154, %v161
    %v163 = vmul.f32 %v160, %v161
    %v164 = vsub.f32 %v145, %v162
    %v165 = vsub.f32 %v147, %v163
    %v166 = vmul.f32 %v164, %v164
    %v167 = vmul.f32 %v165, %v165
    %v168 = vrot.slane %v166, 4
    %v169 = vadd.f32 %v166, %v168
    %v170 = vrot.slane %v169, 2
    %v171 = vadd.f32 %v169, %v170
    %v172 = vrot.slane %v171, 1
    %v173 = vadd.f32 %v171, %v172
    %v174 = vrot.slane %v167, 4
    %v175 = vadd.f32 %v167, %v174
    %v176 = vrot.slane %v175, 2
    %v177 = vadd.f32 %v175, %v176
    %v178 = vrot.slane %v177, 1
    %v179 = vadd.f32 %v177, %v178
    %v180 = vmul.f32 %v173, %v161
    %v181 = vmul.f32 %v179, %v161
    %v182 = vld [vmem:[%s3] ss:$2 sm:$0x3]
    %s183 = scalar_lea.vmem %s3, 1
    %v184 = vld [vmem:[%s183] ss:$2 sm:$0x3]
    %v185 = vadd.f32 %v180, 1e-05
    %v186 = vadd.f32 %v181, 1e-05
    %v187 = vrsqrt.pop %v185
    %v188 = vrsqrt.pop %v186
    %v191 = vcombine.low %v187, %v188
    %v193 = vunpack.c.l.s4 1966171168
    %v194 = vunpack.c.0.s8 %v193
    %v195 = vlaneseq
    %v196 = vshrl.u32 %v195, 7
    %v197 = vsub.s32 %v194, %v196
    %v198 = vrot.slane %v191, %v197
    %v200 = vunpack.c.l.s4 1966171168
    %v201 = vunpack.c.0.s8 %v200
    %v202 = vlaneseq
    %v203 = vshrl.u32 %v202, 7
    %v204 = vsub.s32 %v201, %v203
    %v205 = vrot.slane %v198, %v204
    %v207 = vmul.f32 %v182, %v205
    %v209 = vlaneseq
    %v210 = vshrl.u32 %v209, 7
    %v211 = vsub.s32 0, %v210
    %v212 = vrot.slane %v207, %v211
    %v213 = vlaneseq
    %v214 = vshrl.u32 %v213, 7
    %v215 = vsub.s32 1, %v214
    %v216 = vrot.slane %v207, %v215
    %v219 = vmul.f32 %v164, %v212
    %v220 = vmul.f32 %v165, %v216
    %v222 = vlaneseq
    %v223 = vshrl.u32 %v222, 7
    %v224 = vsub.s32 0, %v223
    %v225 = vrot.slane %v184, %v224
    %v226 = vlaneseq
    %v227 = vshrl.u32 %v226, 7
    %v228 = vsub.s32 1, %v227
    %v229 = vrot.slane %v184, %v228
    %v232 = vadd.f32 %v219, %v225
    %v233 = vadd.f32 %v220, %v229
    %s234 = sld [smem:[#allocation2]]
    %vm235 = vcmp.gt.f32.partialorder %v232, 0.0
    %vm236 = vcmp.gt.f32.partialorder %v233, 0.0
    %v237 = vstv %s234
    %v238 = vmul.f32 %v237, %v232
    %v239 = vmul.f32 %v237, %v233
    %v240 = vsel %vm235, %v232, %v238
    %v241 = vsel %vm236, %v233, %v239
    %242 = vst [vmem:[#allocation8] sm:$0xff] %v240
    %243 = vst [vmem:[#allocation8 + $0x8] sm:$0xff] %v241
    // Predicated region
    $region26: #{tpu_custom_call.1} parent=1 // pred_check
      _
    $region27: #{tpu_custom_call.1} parent=1 // pred_check_branch
      %245 = sbr.rel (0) target = $region29
    $region28: #{tpu_custom_call.1} parent=1 // pred_region
      %s247 = ssub.s32 256, 256
      %248 = vsyncadd [#allocation5], %s247
      %s250 = sshll.u32 [#allocation8], 4
      %s251 = int_to_ptr.vmem [resolvable:$true] %s250
      %253 = dma.vmem_to_hbm [thread:$0]  %s251, 256, %s4, [#allocation5]
    $region29: #{tpu_custom_call.1} parent=1 // pred_fallthru
      _
    // Predicated region
    $region30: #{tpu_custom_call.1} parent=1 // pred_check
      _
    $region31: #{tpu_custom_call.1} parent=1 // pred_check_branch
      %255 = sbr.rel (0) target = $region33
    $region32: #{tpu_custom_call.1} parent=1 // pred_region
      %256 = dma.done [#allocation5], 256
    $region33: #{tpu_custom_call.1} parent=1 // pred_fallthru
      _
    %257 = vsyncpa [#allocation4], 1
    %258 = vsyncpa [#allocation7], 1
    %259 = vsyncpa [#allocation5], 1

</llo_original>
